<compile_context>
chip_gen: v7x
topology: tpu7x:2x2x1
jax: 0.10.0
libtpu: 0.0.40
codegen_flags: <defaults>
</compile_context>

<pallas_src>
import functools

import jax
import jax.numpy as jnp
from jax.experimental import pallas as pl
from jax.experimental.pallas import tpu as pltpu

# ----------------------------------------------------------------------------
# Small, TPU-friendly stand-ins for the (huge) reference sizes
#   reference: d_model = 44544, vocab_size = 65024
# ----------------------------------------------------------------------------
D_MODEL = 128
VOCAB_SIZE = 256


def _round_up(x, m):
    return ((x + m - 1) // m) * m


# ----------------------------------------------------------------------------
# Kernel 1: embedding gather  (ids -> rows of the embedding table)
#   - ids are scalar-prefetched into SMEM
#   - table stays in HBM (memory_space=pl.ANY); each grid step issues
#     ROWS_PER_STEP outstanding row DMAs into a VMEM staging buffer, then
#     stores the whole (8, d) tile to the output block (unmasked, aligned).
# ----------------------------------------------------------------------------
ROWS_PER_STEP = 8


def _gather_kernel(ids_ref, table_hbm, out_ref, buf, sems):
    base = pl.program_id(0) * ROWS_PER_STEP
    # Issue all row DMAs first (ROWS_PER_STEP outstanding), then wait.
    for r in range(ROWS_PER_STEP):
        pltpu.make_async_copy(
            table_hbm.at[ids_ref[base + r]], buf.at[r], sems.at[r]
        ).start()
    for r in range(ROWS_PER_STEP):
        # Static .at[0] source only provides the transfer size for the wait.
        pltpu.make_async_copy(table_hbm.at[0], buf.at[r], sems.at[r]).wait()
    out_ref[...] = buf[...]


def embedding_lookup(table, ids):
    """table: [V, D], ids: [N] int32 -> [N, D] (table dtype)."""
    n = ids.shape[0]
    _, d = table.shape

    n_pad = _round_up(n, ROWS_PER_STEP)
    ids_p = jnp.pad(ids.astype(jnp.int32), (0, n_pad - n))  # pad with row 0 (valid)

    grid_spec = pltpu.PrefetchScalarGridSpec(
        num_scalar_prefetch=1,
        grid=(n_pad // ROWS_PER_STEP,),
        in_specs=[pl.BlockSpec(memory_space=pl.ANY)],  # table stays in HBM
        out_specs=pl.BlockSpec((ROWS_PER_STEP, d), lambda i, ids: (i, 0)),
        scratch_shapes=[
            pltpu.VMEM((ROWS_PER_STEP, d), table.dtype),
            pltpu.SemaphoreType.DMA((ROWS_PER_STEP,)),
        ],
    )
    out = pl.pallas_call(
        _gather_kernel,
        grid_spec=grid_spec,
        out_shape=jax.ShapeDtypeStruct((n_pad, d), table.dtype),
        compiler_params=pltpu.CompilerParams(
            dimension_semantics=("arbitrary",)
        ),
    )(ids_p, table)
    return out[:n]


# ----------------------------------------------------------------------------
# Kernel 2: output projection  y = x @ W + b
#   - bf16 operands, f32 accumulation directly in the resident output block
#   - bias added (and nothing else) on the last K step
# ----------------------------------------------------------------------------
def _matmul_bias_kernel(x_ref, w_ref, b_ref, o_ref):
    kk = pl.program_id(2)

    @pl.when(kk == 0)
    def _():
        o_ref[...] = jnp.zeros_like(o_ref)

    o_ref[...] += jnp.dot(
        x_ref[...], w_ref[...], preferred_element_type=jnp.float32
    )

    @pl.when(kk == pl.num_programs(2) - 1)
    def _():
        o_ref[...] += b_ref[...]


def linear(x, w, b, *, tm=256, tn=512, tk=512):
    """x: [M, K], w: [K, N], b: [N] -> [M, N] float32 (bf16 MXU operands)."""
    m, k = x.shape
    k2, n = w.shape
    assert k == k2, (k, k2)

    # Tile sizes: capped per perf review, shrunk for small problems, kept
    # (8, 128)-aligned. Pad arrays to tile multiples (zeros in K are inert;
    # padded M rows / N cols are sliced off at the end).
    tm = min(tm, _round_up(m, 8))
    tn = min(tn, _round_up(n, 128))
    tk = min(tk, _round_up(k, 128))
    mp, kp, np_ = _round_up(m, tm), _round_up(k, tk), _round_up(n, tn)

    xp = x.astype(jnp.bfloat16)
    wp = w.astype(jnp.bfloat16)
    bp = b.astype(jnp.float32).reshape(1, n)
    if (mp, kp) != (m, k):
        xp = jnp.pad(xp, ((0, mp - m), (0, kp - k)))
    if (kp, np_) != (k, n):
        wp = jnp.pad(wp, ((0, kp - k), (0, np_ - n)))
    if np_ != n:
        bp = jnp.pad(bp, ((0, 0), (0, np_ - n)))

    grid = (mp // tm, np_ // tn, kp // tk)

    # Explicit VMEM budget (double-buffered bf16 input tiles + resident f32
    # output block + bias) with headroom; stays well under v7x's 64 MiB.
    footprint = 2 * (tm * tk + tk * tn) * 2 + 2 * tm * tn * 4 + 2 * tn * 4
    vmem_limit = int(min(max(2 * footprint, 16 << 20), 48 << 20))

    grid_spec = pltpu.PrefetchScalarGridSpec(
        num_scalar_prefetch=0,
        grid=grid,
        in_specs=[
            pl.BlockSpec((tm, tk), lambda i, j, kk: (i, kk)),
            pl.BlockSpec((tk, tn), lambda i, j, kk: (kk, j)),
            pl.BlockSpec((1, tn), lambda i, j, kk: (0, j)),
        ],
        out_specs=pl.BlockSpec((tm, tn), lambda i, j, kk: (i, j)),
    )
    out = pl.pallas_call(
        _matmul_bias_kernel,
        grid_spec=grid_spec,
        out_shape=jax.ShapeDtypeStruct((mp, np_), jnp.float32),
        compiler_params=pltpu.CompilerParams(
            dimension_semantics=("parallel", "parallel", "arbitrary"),
            vmem_limit_bytes=vmem_limit,
        ),
    )(xp, wp, bp)
    return out[:m, :n]


# ----------------------------------------------------------------------------
# Transformer forward (teacher-forcing path: target_ids is not None)
# ----------------------------------------------------------------------------
def init_params(key, vocab_size=VOCAB_SIZE, d_model=D_MODEL):
    k_emb, k_w, k_b = jax.random.split(key, 3)
    return {
        # nn.Embedding(vocab_size, d_model)
        "embedding": jax.random.normal(k_emb, (vocab_size, d_model), jnp.float32),
        # nn.Linear(d_model, vocab_size): y = x @ W^T + b; W stored transposed,
        # in bf16 to halve weight streaming for the MXU (f32 accumulation kept).
        "w_out": (
            jax.random.normal(k_w, (d_model, vocab_size), jnp.float32) * 0.02
        ).astype(jnp.bfloat16),
        "b_out": jax.random.normal(k_b, (vocab_size,), jnp.float32) * 0.02,
    }


@functools.partial(jax.jit, static_argnums=())
def transformer_forward(params, input_ids, target_ids):
    """input_ids, target_ids: [B, S] int32 -> logits [B, S, vocab] f32."""
    del input_ids  # identity encoder/decoder: encoder memory is unused
    b, s = target_ids.shape
    d = params["embedding"].shape[1]
    v = params["w_out"].shape[1]

    # TODO(synk): `encoder_layers` / `decoder_layers` are undefined globals in
    # the reference module source; they are treated as identity, so the
    # input-side embedding lookup is dead work and is skipped.
    target_embeds = embedding_lookup(
        params["embedding"], target_ids.reshape(-1)
    ).reshape(b, s, d)
    decoder_output = target_embeds

    logits = linear(
        decoder_output.reshape(b * s, d), params["w_out"], params["b_out"]
    ).reshape(b, s, v)
    # TODO(synk): generation path (top_k_top_p_filtering + multinomial sampling)
    # is stochastic host-side decoding and is not implemented as a kernel.
    return logits


if __name__ == "__main__":
    key = jax.random.PRNGKey(0)
    k_params, k_in, k_tgt = jax.random.split(key, 3)

    params = init_params(k_params)

    B, S = 2, 8
    input_ids = jax.random.randint(k_in, (B, S), 0, VOCAB_SIZE, dtype=jnp.int32)
    target_ids = jax.random.randint(k_tgt, (B, S), 0, VOCAB_SIZE, dtype=jnp.int32)

    logits = transformer_forward(params, input_ids, target_ids)
    jax.block_until_ready(logits)

    # sanity check against pure-JAX reference (same bf16-operand / f32-acc path)
    tgt_emb = jnp.take(params["embedding"], target_ids, axis=0)
    ref = (
        jnp.dot(
            tgt_emb.astype(jnp.bfloat16).reshape(B * S, D_MODEL),
            params["w_out"].astype(jnp.bfloat16),
            preferred_element_type=jnp.float32,
        ).reshape(B, S, VOCAB_SIZE)
        + params["b_out"]
    )
    assert logits.shape == (B, S, VOCAB_SIZE), logits.shape
    err = float(jnp.max(jnp.abs(logits - ref)))
    assert jnp.allclose(logits, ref, atol=1e-2, rtol=1e-2), err

    print("KERNEL_OK")
</pallas_src>

<mosaic_0001>
module attributes {stable_mosaic.version = 11 : i64} {
  func.func @_matmul_bias_kernel(%arg0: i32, %arg1: i32, %arg2: i32, %arg3: memref<16x128xbf16, #tpu.memory_space<vmem>>, %arg4: memref<128x256xbf16, #tpu.memory_space<vmem>>, %arg5: memref<1x256xf32, #tpu.memory_space<vmem>>, %arg6: memref<16x256xf32, #tpu.memory_space<vmem>>) attributes {dimension_semantics = [#tpu.dimension_semantics<parallel>, #tpu.dimension_semantics<parallel>, #tpu.dimension_semantics<arbitrary>], iteration_bounds = array<i64: 1, 1, 1>, scalar_prefetch = 0 : i64, scratch_operands = 0 : i64, tpu.core_type = #tpu.core_type<tc>, window_params = [{transform_indices = @transform_0, window_bounds = array<i64: 16, 128>}, {transform_indices = @transform_1, window_bounds = array<i64: 128, 256>}, {transform_indices = @transform_2, window_bounds = array<i64: 1, 256>}, {transform_indices = @transform_3, window_bounds = array<i64: 16, 256>}]} {
    %c0_i32 = arith.constant 0 : i32
    %0 = arith.cmpi eq, %arg2, %c0_i32 : i32
    %1 = arith.extui %0 : i1 to i32
    %c0_i32_0 = arith.constant 0 : i32
    %2 = arith.cmpi ne, %1, %c0_i32_0 : i32
    scf.if %2 {
      %cst_10 = arith.constant 0.000000e+00 : f32
      %12 = vector.broadcast %cst_10 : f32 to vector<16x256xf32>
      %c0_11 = arith.constant 0 : index
      %c0_12 = arith.constant 0 : index
      %13 = vector.load %arg6[%c0_11, %c0_12] : memref<16x256xf32, #tpu.memory_space<vmem>>, vector<16x256xf32>
      tpu.vector_store %arg6[%c0_11, %c0_12], %12 {strides = array<i32>} : memref<16x256xf32, #tpu.memory_space<vmem>>, vector<16x256xf32>,
    } else {
    }
    %c0 = arith.constant 0 : index
    %c0_1 = arith.constant 0 : index
    %3 = vector.load %arg6[%c0, %c0_1] : memref<16x256xf32, #tpu.memory_space<vmem>>, vector<16x256xf32>
    %c0_2 = arith.constant 0 : index
    %c0_3 = arith.constant 0 : index
    %4 = vector.load %arg3[%c0_2, %c0_3] : memref<16x128xbf16, #tpu.memory_space<vmem>>, vector<16x128xbf16>
    %c0_4 = arith.constant 0 : index
    %c0_5 = arith.constant 0 : index
    %5 = vector.load %arg4[%c0_4, %c0_5] : memref<128x256xbf16, #tpu.memory_space<vmem>>, vector<128x256xbf16>
    %cst = arith.constant dense<0.000000e+00> : vector<16x256xf32>
    %6 = tpu.matmul %4, %5, %cst {dimension_numbers = #tpu.dot_dimension_numbers<[1], [0], [0], [1], [0, 0, 1, 1], [], []>} : vector<16x128xbf16>, vector<128x256xbf16>, vector<16x256xf32> -> vector<16x256xf32>
    %7 = arith.addf %3, %6 : vector<16x256xf32>
    %c0_6 = arith.constant 0 : index
    %c0_7 = arith.constant 0 : index
    %8 = vector.load %arg6[%c0_6, %c0_7] : memref<16x256xf32, #tpu.memory_space<vmem>>, vector<16x256xf32>
    tpu.vector_store %arg6[%c0_6, %c0_7], %7 {strides = array<i32>} : memref<16x256xf32, #tpu.memory_space<vmem>>, vector<16x256xf32>,
    %c0_i32_8 = arith.constant 0 : i32
    %9 = arith.cmpi eq, %arg2, %c0_i32_8 : i32
    %10 = arith.extui %9 : i1 to i32
    %c0_i32_9 = arith.constant 0 : i32
    %11 = arith.cmpi ne, %10, %c0_i32_9 : i32
    scf.if %11 {
      %c0_10 = arith.constant 0 : index
      %c0_11 = arith.constant 0 : index
      %12 = vector.load %arg6[%c0_10, %c0_11] : memref<16x256xf32, #tpu.memory_space<vmem>>, vector<16x256xf32>
      %c0_12 = arith.constant 0 : index
      %c0_13 = arith.constant 0 : index
      %13 = vector.load %arg5[%c0_12, %c0_13] : memref<1x256xf32, #tpu.memory_space<vmem>>, vector<1x256xf32>
      %14 = vector.broadcast %13 : vector<1x256xf32> to vector<16x256xf32>
      %15 = arith.addf %12, %14 : vector<16x256xf32>
      %c0_14 = arith.constant 0 : index
      %c0_15 = arith.constant 0 : index
      %16 = vector.load %arg6[%c0_14, %c0_15] : memref<16x256xf32, #tpu.memory_space<vmem>>, vector<16x256xf32>
      tpu.vector_store %arg6[%c0_14, %c0_15], %15 {strides = array<i32>} : memref<16x256xf32, #tpu.memory_space<vmem>>, vector<16x256xf32>,
    } else {
    }
    return
  }
  func.func @transform_0(%arg0: i32, %arg1: i32, %arg2: i32) -> (i32, i32) {
    %c0_i32 = arith.constant 0 : i32
    return %arg0, %arg2 : i32, i32
  }
  func.func @transform_1(%arg0: i32, %arg1: i32, %arg2: i32) -> (i32, i32) {
    %c0_i32 = arith.constant 0 : i32
    return %arg2, %arg1 : i32, i32
  }
  func.func @transform_2(%arg0: i32, %arg1: i32, %arg2: i32) -> (i32, i32) {
    %c0_i32 = arith.constant 0 : i32
    %c0_i32_0 = arith.constant 0 : i32
    return %c0_i32, %arg1 : i32, i32
  }
  func.func @transform_3(%arg0: i32, %arg1: i32, %arg2: i32) -> (i32, i32) {
    %c0_i32 = arith.constant 0 : i32
    return %arg0, %arg1 : i32, i32
  }
}

module attributes {stable_mosaic.version = 11 : i64} {
  func.func @_gather_kernel(%arg0: i32, %arg1: memref<16xi32, #tpu.memory_space<smem>>, %arg2: memref<256x128xf32, #tpu.memory_space<any>>, %arg3: memref<8x128xf32, #tpu.memory_space<vmem>>, %arg4: memref<8x128xf32, #tpu.memory_space<vmem>>, %arg5: memref<8x!tpu.dma_semaphore, #tpu.memory_space<semaphore_mem>>) attributes {dimension_semantics = [#tpu.dimension_semantics<arbitrary>], iteration_bounds = array<i64: 2>, scalar_prefetch = 1 : i64, scratch_operands = 2 : i64, tpu.core_type = #tpu.core_type<tc>, window_params = [{}, {transform_indices = @transform_1, window_bounds = array<i64: 8, 128>}]} {
    %c8_i32 = arith.constant 8 : i32
    %0 = arith.muli %arg0, %c8_i32 : i32
    %c0_i32 = arith.constant 0 : i32
    %1 = arith.addi %0, %c0_i32 : i32
    %2 = arith.index_cast %1 : i32 to index
    %3 = memref.load %arg1[%2] : memref<16xi32, #tpu.memory_space<smem>>
    %c0_i32_0 = arith.constant 0 : i32
    %c0_i32_1 = arith.constant 0 : i32
    %c0_i32_2 = arith.constant 0 : i32
    %4 = tpu.memref_slice %arg2[%3, %c0_i32_2] : memref<256x128xf32, #tpu.memory_space<any>> -> memref<1x128xf32, #tpu.memory_space<any>>
    %5 = tpu.memref_squeeze %4 : memref<1x128xf32, #tpu.memory_space<any>> -> memref<128xf32, #tpu.memory_space<any>>
    %c0_i32_3 = arith.constant 0 : i32
    %6 = tpu.memref_slice %arg4[%c0_i32_0, %c0_i32_3] : memref<8x128xf32, #tpu.memory_space<vmem>> -> memref<1x128xf32, #tpu.memory_space<vmem>>
    %7 = tpu.memref_squeeze %6 : memref<1x128xf32, #tpu.memory_space<vmem>> -> memref<128xf32, #tpu.memory_space<vmem>>
    %8 = tpu.memref_slice %arg5[%c0_i32_1] : memref<8x!tpu.dma_semaphore, #tpu.memory_space<semaphore_mem>> -> memref<1x!tpu.dma_semaphore, #tpu.memory_space<semaphore_mem>>
    %9 = tpu.memref_squeeze %8 : memref<1x!tpu.dma_semaphore, #tpu.memory_space<semaphore_mem>> -> memref<!tpu.dma_semaphore, #tpu.memory_space<semaphore_mem>>
    tpu.enqueue_dma source(%5 : memref<128xf32, #tpu.memory_space<any>>) target(%7 : memref<128xf32, #tpu.memory_space<vmem>>) target_semaphore(%9 : memref<!tpu.dma_semaphore, #tpu.memory_space<semaphore_mem>>)
    %c1_i32 = arith.constant 1 : i32
    %10 = arith.addi %0, %c1_i32 : i32
    %11 = arith.index_cast %10 : i32 to index
    %12 = memref.load %arg1[%11] : memref<16xi32, #tpu.memory_space<smem>>
    %c1_i32_4 = arith.constant 1 : i32
    %c1_i32_5 = arith.constant 1 : i32
    %c0_i32_6 = arith.constant 0 : i32
    %13 = tpu.memref_slice %arg2[%12, %c0_i32_6] : memref<256x128xf32, #tpu.memory_space<any>> -> memref<1x128xf32, #tpu.memory_space<any>>
    %14 = tpu.memref_squeeze %13 : memref<1x128xf32, #tpu.memory_space<any>> -> memref<128xf32, #tpu.memory_space<any>>
    %c0_i32_7 = arith.constant 0 : i32
    %15 = tpu.memref_slice %arg4[%c1_i32_4, %c0_i32_7] : memref<8x128xf32, #tpu.memory_space<vmem>> -> memref<1x128xf32, #tpu.memory_space<vmem>>
    %16 = tpu.memref_squeeze %15 : memref<1x128xf32, #tpu.memory_space<vmem>> -> memref<128xf32, #tpu.memory_space<vmem>>
    %17 = tpu.memref_slice %arg5[%c1_i32_5] : memref<8x!tpu.dma_semaphore, #tpu.memory_space<semaphore_mem>> -> memref<1x!tpu.dma_semaphore, #tpu.memory_space<semaphore_mem>>
    %18 = tpu.memref_squeeze %17 : memref<1x!tpu.dma_semaphore, #tpu.memory_space<semaphore_mem>> -> memref<!tpu.dma_semaphore, #tpu.memory_space<semaphore_mem>>
    tpu.enqueue_dma source(%14 : memref<128xf32, #tpu.memory_space<any>>) target(%16 : memref<128xf32, #tpu.memory_space<vmem>>) target_semaphore(%18 : memref<!tpu.dma_semaphore, #tpu.memory_space<semaphore_mem>>)
    %c2_i32 = arith.constant 2 : i32
    %19 = arith.addi %0, %c2_i32 : i32
    %20 = arith.index_cast %19 : i32 to index
    %21 = memref.load %arg1[%20] : memref<16xi32, #tpu.memory_space<smem>>
    %c2_i32_8 = arith.constant 2 : i32
    %c2_i32_9 = arith.constant 2 : i32
    %c0_i32_10 = arith.constant 0 : i32
    %22 = tpu.memref_slice %arg2[%21, %c0_i32_10] : memref<256x128xf32, #tpu.memory_space<any>> -> memref<1x128xf32, #tpu.memory_space<any>>
    %23 = tpu.memref_squeeze %22 : memref<1x128xf32, #tpu.memory_space<any>> -> memref<128xf32, #tpu.memory_space<any>>
    %c0_i32_11 = arith.constant 0 : i32
    %24 = tpu.memref_slice %arg4[%c2_i32_8, %c0_i32_11] : memref<8x128xf32, #tpu.memory_space<vmem>> -> memref<1x128xf32, #tpu.memory_space<vmem>>
    %25 = tpu.memref_squeeze %24 : memref<1x128xf32, #tpu.memory_space<vmem>> -> memref<128xf32, #tpu.memory_space<vmem>>
    %26 = tpu.memref_slice %arg5[%c2_i32_9] : memref<8x!tpu.dma_semaphore, #tpu.memory_space<semaphore_mem>> -> memref<1x!tpu.dma_semaphore, #tpu.memory_space<semaphore_mem>>
    %27 = tpu.memref_squeeze %26 : memref<1x!tpu.dma_semaphore, #tpu.memory_space<semaphore_mem>> -> memref<!tpu.dma_semaphore, #tpu.memory_space<semaphore_mem>>
    tpu.enqueue_dma source(%23 : memref<128xf32, #tpu.memory_space<any>>) target(%25 : memref<128xf32, #tpu.memory_space<vmem>>) target_semaphore(%27 : memref<!tpu.dma_semaphore, #tpu.memory_space<semaphore_mem>>)
    %c3_i32 = arith.constant 3 : i32
    %28 = arith.addi %0, %c3_i32 : i32
    %29 = arith.index_cast %28 : i32 to index
    %30 = memref.load %arg1[%29] : memref<16xi32, #tpu.memory_space<smem>>
    %c3_i32_12 = arith.constant 3 : i32
    %c3_i32_13 = arith.constant 3 : i32
    %c0_i32_14 = arith.constant 0 : i32
    %31 = tpu.memref_slice %arg2[%30, %c0_i32_14] : memref<256x128xf32, #tpu.memory_space<any>> -> memref<1x128xf32, #tpu.memory_space<any>>
    %32 = tpu.memref_squeeze %31 : memref<1x128xf32, #tpu.memory_space<any>> -> memref<128xf32, #tpu.memory_space<any>>
    %c0_i32_15 = arith.constant 0 : i32
    %33 = tpu.memref_slice %arg4[%c3_i32_12, %c0_i32_15] : memref<8x128xf32, #tpu.memory_space<vmem>> -> memref<1x128xf32, #tpu.memory_space<vmem>>
    %34 = tpu.memref_squeeze %33 : memref<1x128xf32, #tpu.memory_space<vmem>> -> memref<128xf32, #tpu.memory_space<vmem>>
    %35 = tpu.memref_slice %arg5[%c3_i32_13] : memref<8x!tpu.dma_semaphore, #tpu.memory_space<semaphore_mem>> -> memref<1x!tpu.dma_semaphore, #tpu.memory_space<semaphore_mem>>
    %36 = tpu.memref_squeeze %35 : memref<1x!tpu.dma_semaphore, #tpu.memory_space<semaphore_mem>> -> memref<!tpu.dma_semaphore, #tpu.memory_space<semaphore_mem>>
    tpu.enqueue_dma source(%32 : memref<128xf32, #tpu.memory_space<any>>) target(%34 : memref<128xf32, #tpu.memory_space<vmem>>) target_semaphore(%36 : memref<!tpu.dma_semaphore, #tpu.memory_space<semaphore_mem>>)
    %c4_i32 = arith.constant 4 : i32
    %37 = arith.addi %0, %c4_i32 : i32
    %38 = arith.index_cast %37 : i32 to index
    %39 = memref.load %arg1[%38] : memref<16xi32, #tpu.memory_space<smem>>
    %c4_i32_16 = arith.constant 4 : i32
    %c4_i32_17 = arith.constant 4 : i32
    %c0_i32_18 = arith.constant 0 : i32
    %40 = tpu.memref_slice %arg2[%39, %c0_i32_18] : memref<256x128xf32, #tpu.memory_space<any>> -> memref<1x128xf32, #tpu.memory_space<any>>
    %41 = tpu.memref_squeeze %40 : memref<1x128xf32, #tpu.memory_space<any>> -> memref<128xf32, #tpu.memory_space<any>>
    %c0_i32_19 = arith.constant 0 : i32
    %42 = tpu.memref_slice %arg4[%c4_i32_16, %c0_i32_19] : memref<8x128xf32, #tpu.memory_space<vmem>> -> memref<1x128xf32, #tpu.memory_space<vmem>>
    %43 = tpu.memref_squeeze %42 : memref<1x128xf32, #tpu.memory_space<vmem>> -> memref<128xf32, #tpu.memory_space<vmem>>
    %44 = tpu.memref_slice %arg5[%c4_i32_17] : memref<8x!tpu.dma_semaphore, #tpu.memory_space<semaphore_mem>> -> memref<1x!tpu.dma_semaphore, #tpu.memory_space<semaphore_mem>>
    %45 = tpu.memref_squeeze %44 : memref<1x!tpu.dma_semaphore, #tpu.memory_space<semaphore_mem>> -> memref<!tpu.dma_semaphore, #tpu.memory_space<semaphore_mem>>
    tpu.enqueue_dma source(%41 : memref<128xf32, #tpu.memory_space<any>>) target(%43 : memref<128xf32, #tpu.memory_space<vmem>>) target_semaphore(%45 : memref<!tpu.dma_semaphore, #tpu.memory_space<semaphore_mem>>)
    %c5_i32 = arith.constant 5 : i32
    %46 = arith.addi %0, %c5_i32 : i32
    %47 = arith.index_cast %46 : i32 to index
    %48 = memref.load %arg1[%47] : memref<16xi32, #tpu.memory_space<smem>>
    %c5_i32_20 = arith.constant 5 : i32
    %c5_i32_21 = arith.constant 5 : i32
    %c0_i32_22 = arith.constant 0 : i32
    %49 = tpu.memref_slice %arg2[%48, %c0_i32_22] : memref<256x128xf32, #tpu.memory_space<any>> -> memref<1x128xf32, #tpu.memory_space<any>>
    %50 = tpu.memref_squeeze %49 : memref<1x128xf32, #tpu.memory_space<any>> -> memref<128xf32, #tpu.memory_space<any>>
    %c0_i32_23 = arith.constant 0 : i32
    %51 = tpu.memref_slice %arg4[%c5_i32_20, %c0_i32_23] : memref<8x128xf32, #tpu.memory_space<vmem>> -> memref<1x128xf32, #tpu.memory_space<vmem>>
    %52 = tpu.memref_squeeze %51 : memref<1x128xf32, #tpu.memory_space<vmem>> -> memref<128xf32, #tpu.memory_space<vmem>>
    %53 = tpu.memref_slice %arg5[%c5_i32_21] : memref<8x!tpu.dma_semaphore, #tpu.memory_space<semaphore_mem>> -> memref<1x!tpu.dma_semaphore, #tpu.memory_space<semaphore_mem>>
    %54 = tpu.memref_squeeze %53 : memref<1x!tpu.dma_semaphore, #tpu.memory_space<semaphore_mem>> -> memref<!tpu.dma_semaphore, #tpu.memory_space<semaphore_mem>>
    tpu.enqueue_dma source(%50 : memref<128xf32, #tpu.memory_space<any>>) target(%52 : memref<128xf32, #tpu.memory_space<vmem>>) target_semaphore(%54 : memref<!tpu.dma_semaphore, #tpu.memory_space<semaphore_mem>>)
    %c6_i32 = arith.constant 6 : i32
    %55 = arith.addi %0, %c6_i32 : i32
    %56 = arith.index_cast %55 : i32 to index
    %57 = memref.load %arg1[%56] : memref<16xi32, #tpu.memory_space<smem>>
    %c6_i32_24 = arith.constant 6 : i32
    %c6_i32_25 = arith.constant 6 : i32
    %c0_i32_26 = arith.constant 0 : i32
    %58 = tpu.memref_slice %arg2[%57, %c0_i32_26] : memref<256x128xf32, #tpu.memory_space<any>> -> memref<1x128xf32, #tpu.memory_space<any>>
    %59 = tpu.memref_squeeze %58 : memref<1x128xf32, #tpu.memory_space<any>> -> memref<128xf32, #tpu.memory_space<any>>
    %c0_i32_27 = arith.constant 0 : i32
    %60 = tpu.memref_slice %arg4[%c6_i32_24, %c0_i32_27] : memref<8x128xf32, #tpu.memory_space<vmem>> -> memref<1x128xf32, #tpu.memory_space<vmem>>
    %61 = tpu.memref_squeeze %60 : memref<1x128xf32, #tpu.memory_space<vmem>> -> memref<128xf32, #tpu.memory_space<vmem>>
    %62 = tpu.memref_slice %arg5[%c6_i32_25] : memref<8x!tpu.dma_semaphore, #tpu.memory_space<semaphore_mem>> -> memref<1x!tpu.dma_semaphore, #tpu.memory_space<semaphore_mem>>
    %63 = tpu.memref_squeeze %62 : memref<1x!tpu.dma_semaphore, #tpu.memory_space<semaphore_mem>> -> memref<!tpu.dma_semaphore, #tpu.memory_space<semaphore_mem>>
    tpu.enqueue_dma source(%59 : memref<128xf32, #tpu.memory_space<any>>) target(%61 : memref<128xf32, #tpu.memory_space<vmem>>) target_semaphore(%63 : memref<!tpu.dma_semaphore, #tpu.memory_space<semaphore_mem>>)
    %c7_i32 = arith.constant 7 : i32
    %64 = arith.addi %0, %c7_i32 : i32
    %65 = arith.index_cast %64 : i32 to index
    %66 = memref.load %arg1[%65] : memref<16xi32, #tpu.memory_space<smem>>
    %c7_i32_28 = arith.constant 7 : i32
    %c7_i32_29 = arith.constant 7 : i32
    %c0_i32_30 = arith.constant 0 : i32
    %67 = tpu.memref_slice %arg2[%66, %c0_i32_30] : memref<256x128xf32, #tpu.memory_space<any>> -> memref<1x128xf32, #tpu.memory_space<any>>
    %68 = tpu.memref_squeeze %67 : memref<1x128xf32, #tpu.memory_space<any>> -> memref<128xf32, #tpu.memory_space<any>>
    %c0_i32_31 = arith.constant 0 : i32
    %69 = tpu.memref_slice %arg4[%c7_i32_28, %c0_i32_31] : memref<8x128xf32, #tpu.memory_space<vmem>> -> memref<1x128xf32, #tpu.memory_space<vmem>>
    %70 = tpu.memref_squeeze %69 : memref<1x128xf32, #tpu.memory_space<vmem>> -> memref<128xf32, #tpu.memory_space<vmem>>
    %71 = tpu.memref_slice %arg5[%c7_i32_29] : memref<8x!tpu.dma_semaphore, #tpu.memory_space<semaphore_mem>> -> memref<1x!tpu.dma_semaphore, #tpu.memory_space<semaphore_mem>>
    %72 = tpu.memref_squeeze %71 : memref<1x!tpu.dma_semaphore, #tpu.memory_space<semaphore_mem>> -> memref<!tpu.dma_semaphore, #tpu.memory_space<semaphore_mem>>
    tpu.enqueue_dma source(%68 : memref<128xf32, #tpu.memory_space<any>>) target(%70 : memref<128xf32, #tpu.memory_space<vmem>>) target_semaphore(%72 : memref<!tpu.dma_semaphore, #tpu.memory_space<semaphore_mem>>)
    %c0_i32_32 = arith.constant 0 : i32
    %c0_i32_33 = arith.constant 0 : i32
    %c0_i32_34 = arith.constant 0 : i32
    %c0_i32_35 = arith.constant 0 : i32
    %73 = tpu.memref_slice %arg2[%c0_i32_32, %c0_i32_35] : memref<256x128xf32, #tpu.memory_space<any>> -> memref<1x128xf32, #tpu.memory_space<any>>
    %74 = tpu.memref_squeeze %73 : memref<1x128xf32, #tpu.memory_space<any>> -> memref<128xf32, #tpu.memory_space<any>>
    %c0_i32_36 = arith.constant 0 : i32
    %75 = tpu.memref_slice %arg4[%c0_i32_33, %c0_i32_36] : memref<8x128xf32, #tpu.memory_space<vmem>> -> memref<1x128xf32, #tpu.memory_space<vmem>>
    %76 = tpu.memref_squeeze %75 : memref<1x128xf32, #tpu.memory_space<vmem>> -> memref<128xf32, #tpu.memory_space<vmem>>
    %77 = tpu.memref_slice %arg5[%c0_i32_34] : memref<8x!tpu.dma_semaphore, #tpu.memory_space<semaphore_mem>> -> memref<1x!tpu.dma_semaphore, #tpu.memory_space<semaphore_mem>>
    %78 = tpu.memref_squeeze %77 : memref<1x!tpu.dma_semaphore, #tpu.memory_space<semaphore_mem>> -> memref<!tpu.dma_semaphore, #tpu.memory_space<semaphore_mem>>
    tpu.wait_dma2 semaphore(%78 : memref<!tpu.dma_semaphore, #tpu.memory_space<semaphore_mem>>) src(%74 : memref<128xf32, #tpu.memory_space<any>>) dst(%76 : memref<128xf32, #tpu.memory_space<vmem>>)
    %c0_i32_37 = arith.constant 0 : i32
    %c1_i32_38 = arith.constant 1 : i32
    %c1_i32_39 = arith.constant 1 : i32
    %c0_i32_40 = arith.constant 0 : i32
    %79 = tpu.memref_slice %arg2[%c0_i32_37, %c0_i32_40] : memref<256x128xf32, #tpu.memory_space<any>> -> memref<1x128xf32, #tpu.memory_space<any>>
    %80 = tpu.memref_squeeze %79 : memref<1x128xf32, #tpu.memory_space<any>> -> memref<128xf32, #tpu.memory_space<any>>
    %c0_i32_41 = arith.constant 0 : i32
    %81 = tpu.memref_slice %arg4[%c1_i32_38, %c0_i32_41] : memref<8x128xf32, #tpu.memory_space<vmem>> -> memref<1x128xf32, #tpu.memory_space<vmem>>
    %82 = tpu.memref_squeeze %81 : memref<1x128xf32, #tpu.memory_space<vmem>> -> memref<128xf32, #tpu.memory_space<vmem>>
    %83 = tpu.memref_slice %arg5[%c1_i32_39] : memref<8x!tpu.dma_semaphore, #tpu.memory_space<semaphore_mem>> -> memref<1x!tpu.dma_semaphore, #tpu.memory_space<semaphore_mem>>
    %84 = tpu.memref_squeeze %83 : memref<1x!tpu.dma_semaphore, #tpu.memory_space<semaphore_mem>> -> memref<!tpu.dma_semaphore, #tpu.memory_space<semaphore_mem>>
    tpu.wait_dma2 semaphore(%84 : memref<!tpu.dma_semaphore, #tpu.memory_space<semaphore_mem>>) src(%80 : memref<128xf32, #tpu.memory_space<any>>) dst(%82 : memref<128xf32, #tpu.memory_space<vmem>>)
    %c0_i32_42 = arith.constant 0 : i32
    %c2_i32_43 = arith.constant 2 : i32
    %c2_i32_44 = arith.constant 2 : i32
    %c0_i32_45 = arith.constant 0 : i32
    %85 = tpu.memref_slice %arg2[%c0_i32_42, %c0_i32_45] : memref<256x128xf32, #tpu.memory_space<any>> -> memref<1x128xf32, #tpu.memory_space<any>>
    %86 = tpu.memref_squeeze %85 : memref<1x128xf32, #tpu.memory_space<any>> -> memref<128xf32, #tpu.memory_space<any>>
    %c0_i32_46 = arith.constant 0 : i32
    %87 = tpu.memref_slice %arg4[%c2_i32_43, %c0_i32_46] : memref<8x128xf32, #tpu.memory_space<vmem>> -> memref<1x128xf32, #tpu.memory_space<vmem>>
    %88 = tpu.memref_squeeze %87 : memref<1x128xf32, #tpu.memory_space<vmem>> -> memref<128xf32, #tpu.memory_space<vmem>>
    %89 = tpu.memref_slice %arg5[%c2_i32_44] : memref<8x!tpu.dma_semaphore, #tpu.memory_space<semaphore_mem>> -> memref<1x!tpu.dma_semaphore, #tpu.memory_space<semaphore_mem>>
    %90 = tpu.memref_squeeze %89 : memref<1x!tpu.dma_semaphore, #tpu.memory_space<semaphore_mem>> -> memref<!tpu.dma_semaphore, #tpu.memory_space<semaphore_mem>>
    tpu.wait_dma2 semaphore(%90 : memref<!tpu.dma_semaphore, #tpu.memory_space<semaphore_mem>>) src(%86 : memref<128xf32, #tpu.memory_space<any>>) dst(%88 : memref<128xf32, #tpu.memory_space<vmem>>)
    %c0_i32_47 = arith.constant 0 : i32
    %c3_i32_48 = arith.constant 3 : i32
    %c3_i32_49 = arith.constant 3 : i32
    %c0_i32_50 = arith.constant 0 : i32
    %91 = tpu.memref_slice %arg2[%c0_i32_47, %c0_i32_50] : memref<256x128xf32, #tpu.memory_space<any>> -> memref<1x128xf32, #tpu.memory_space<any>>
    %92 = tpu.memref_squeeze %91 : memref<1x128xf32, #tpu.memory_space<any>> -> memref<128xf32, #tpu.memory_space<any>>
    %c0_i32_51 = arith.constant 0 : i32
    %93 = tpu.memref_slice %arg4[%c3_i32_48, %c0_i32_51] : memref<8x128xf32, #tpu.memory_space<vmem>> -> memref<1x128xf32, #tpu.memory_space<vmem>>
    %94 = tpu.memref_squeeze %93 : memref<1x128xf32, #tpu.memory_space<vmem>> -> memref<128xf32, #tpu.memory_space<vmem>>
    %95 = tpu.memref_slice %arg5[%c3_i32_49] : memref<8x!tpu.dma_semaphore, #tpu.memory_space<semaphore_mem>> -> memref<1x!tpu.dma_semaphore, #tpu.memory_space<semaphore_mem>>
    %96 = tpu.memref_squeeze %95 : memref<1x!tpu.dma_semaphore, #tpu.memory_space<semaphore_mem>> -> memref<!tpu.dma_semaphore, #tpu.memory_space<semaphore_mem>>
    tpu.wait_dma2 semaphore(%96 : memref<!tpu.dma_semaphore, #tpu.memory_space<semaphore_mem>>) src(%92 : memref<128xf32, #tpu.memory_space<any>>) dst(%94 : memref<128xf32, #tpu.memory_space<vmem>>)
    %c0_i32_52 = arith.constant 0 : i32
    %c4_i32_53 = arith.constant 4 : i32
    %c4_i32_54 = arith.constant 4 : i32
    %c0_i32_55 = arith.constant 0 : i32
    %97 = tpu.memref_slice %arg2[%c0_i32_52, %c0_i32_55] : memref<256x128xf32, #tpu.memory_space<any>> -> memref<1x128xf32, #tpu.memory_space<any>>
    %98 = tpu.memref_squeeze %97 : memref<1x128xf32, #tpu.memory_space<any>> -> memref<128xf32, #tpu.memory_space<any>>
    %c0_i32_56 = arith.constant 0 : i32
    %99 = tpu.memref_slice %arg4[%c4_i32_53, %c0_i32_56] : memref<8x128xf32, #tpu.memory_space<vmem>> -> memref<1x128xf32, #tpu.memory_space<vmem>>
    %100 = tpu.memref_squeeze %99 : memref<1x128xf32, #tpu.memory_space<vmem>> -> memref<128xf32, #tpu.memory_space<vmem>>
    %101 = tpu.memref_slice %arg5[%c4_i32_54] : memref<8x!tpu.dma_semaphore, #tpu.memory_space<semaphore_mem>> -> memref<1x!tpu.dma_semaphore, #tpu.memory_space<semaphore_mem>>
    %102 = tpu.memref_squeeze %101 : memref<1x!tpu.dma_semaphore, #tpu.memory_space<semaphore_mem>> -> memref<!tpu.dma_semaphore, #tpu.memory_space<semaphore_mem>>
    tpu.wait_dma2 semaphore(%102 : memref<!tpu.dma_semaphore, #tpu.memory_space<semaphore_mem>>) src(%98 : memref<128xf32, #tpu.memory_space<any>>) dst(%100 : memref<128xf32, #tpu.memory_space<vmem>>)
    %c0_i32_57 = arith.constant 0 : i32
    %c5_i32_58 = arith.constant 5 : i32
    %c5_i32_59 = arith.constant 5 : i32
    %c0_i32_60 = arith.constant 0 : i32
    %103 = tpu.memref_slice %arg2[%c0_i32_57, %c0_i32_60] : memref<256x128xf32, #tpu.memory_space<any>> -> memref<1x128xf32, #tpu.memory_space<any>>
    %104 = tpu.memref_squeeze %103 : memref<1x128xf32, #tpu.memory_space<any>> -> memref<128xf32, #tpu.memory_space<any>>
    %c0_i32_61 = arith.constant 0 : i32
    %105 = tpu.memref_slice %arg4[%c5_i32_58, %c0_i32_61] : memref<8x128xf32, #tpu.memory_space<vmem>> -> memref<1x128xf32, #tpu.memory_space<vmem>>
    %106 = tpu.memref_squeeze %105 : memref<1x128xf32, #tpu.memory_space<vmem>> -> memref<128xf32, #tpu.memory_space<vmem>>
    %107 = tpu.memref_slice %arg5[%c5_i32_59] : memref<8x!tpu.dma_semaphore, #tpu.memory_space<semaphore_mem>> -> memref<1x!tpu.dma_semaphore, #tpu.memory_space<semaphore_mem>>
    %108 = tpu.memref_squeeze %107 : memref<1x!tpu.dma_semaphore, #tpu.memory_space<semaphore_mem>> -> memref<!tpu.dma_semaphore, #tpu.memory_space<semaphore_mem>>
    tpu.wait_dma2 semaphore(%108 : memref<!tpu.dma_semaphore, #tpu.memory_space<semaphore_mem>>) src(%104 : memref<128xf32, #tpu.memory_space<any>>) dst(%106 : memref<128xf32, #tpu.memory_space<vmem>>)
    %c0_i32_62 = arith.constant 0 : i32
    %c6_i32_63 = arith.constant 6 : i32
    %c6_i32_64 = arith.constant 6 : i32
    %c0_i32_65 = arith.constant 0 : i32
    %109 = tpu.memref_slice %arg2[%c0_i32_62, %c0_i32_65] : memref<256x128xf32, #tpu.memory_space<any>> -> memref<1x128xf32, #tpu.memory_space<any>>
    %110 = tpu.memref_squeeze %109 : memref<1x128xf32, #tpu.memory_space<any>> -> memref<128xf32, #tpu.memory_space<any>>
    %c0_i32_66 = arith.constant 0 : i32
    %111 = tpu.memref_slice %arg4[%c6_i32_63, %c0_i32_66] : memref<8x128xf32, #tpu.memory_space<vmem>> -> memref<1x128xf32, #tpu.memory_space<vmem>>
    %112 = tpu.memref_squeeze %111 : memref<1x128xf32, #tpu.memory_space<vmem>> -> memref<128xf32, #tpu.memory_space<vmem>>
    %113 = tpu.memref_slice %arg5[%c6_i32_64] : memref<8x!tpu.dma_semaphore, #tpu.memory_space<semaphore_mem>> -> memref<1x!tpu.dma_semaphore, #tpu.memory_space<semaphore_mem>>
    %114 = tpu.memref_squeeze %113 : memref<1x!tpu.dma_semaphore, #tpu.memory_space<semaphore_mem>> -> memref<!tpu.dma_semaphore, #tpu.memory_space<semaphore_mem>>
    tpu.wait_dma2 semaphore(%114 : memref<!tpu.dma_semaphore, #tpu.memory_space<semaphore_mem>>) src(%110 : memref<128xf32, #tpu.memory_space<any>>) dst(%112 : memref<128xf32, #tpu.memory_space<vmem>>)
    %c0_i32_67 = arith.constant 0 : i32
    %c7_i32_68 = arith.constant 7 : i32
    %c7_i32_69 = arith.constant 7 : i32
    %c0_i32_70 = arith.constant 0 : i32
    %115 = tpu.memref_slice %arg2[%c0_i32_67, %c0_i32_70] : memref<256x128xf32, #tpu.memory_space<any>> -> memref<1x128xf32, #tpu.memory_space<any>>
    %116 = tpu.memref_squeeze %115 : memref<1x128xf32, #tpu.memory_space<any>> -> memref<128xf32, #tpu.memory_space<any>>
    %c0_i32_71 = arith.constant 0 : i32
    %117 = tpu.memref_slice %arg4[%c7_i32_68, %c0_i32_71] : memref<8x128xf32, #tpu.memory_space<vmem>> -> memref<1x128xf32, #tpu.memory_space<vmem>>
    %118 = tpu.memref_squeeze %117 : memref<1x128xf32, #tpu.memory_space<vmem>> -> memref<128xf32, #tpu.memory_space<vmem>>
    %119 = tpu.memref_slice %arg5[%c7_i32_69] : memref<8x!tpu.dma_semaphore, #tpu.memory_space<semaphore_mem>> -> memref<1x!tpu.dma_semaphore, #tpu.memory_space<semaphore_mem>>
    %120 = tpu.memref_squeeze %119 : memref<1x!tpu.dma_semaphore, #tpu.memory_space<semaphore_mem>> -> memref<!tpu.dma_semaphore, #tpu.memory_space<semaphore_mem>>
    tpu.wait_dma2 semaphore(%120 : memref<!tpu.dma_semaphore, #tpu.memory_space<semaphore_mem>>) src(%116 : memref<128xf32, #tpu.memory_space<any>>) dst(%118 : memref<128xf32, #tpu.memory_space<vmem>>)
    %c0 = arith.constant 0 : index
    %c0_72 = arith.constant 0 : index
    %121 = vector.load %arg4[%c0, %c0_72] : memref<8x128xf32, #tpu.memory_space<vmem>>, vector<8x128xf32>
    %c0_73 = arith.constant 0 : index
    %c0_74 = arith.constant 0 : index
    %122 = vector.load %arg3[%c0_73, %c0_74] : memref<8x128xf32, #tpu.memory_space<vmem>>, vector<8x128xf32>
    tpu.vector_store %arg3[%c0_73, %c0_74], %121 {strides = array<i32>} : memref<8x128xf32, #tpu.memory_space<vmem>>, vector<8x128xf32>,
    return
  }
  func.func @transform_1(%arg0: i32, %arg1: memref<16xi32, #tpu.memory_space<smem>>) -> (i32, i32) {
    %c0_i32 = arith.constant 0 : i32
    %c0_i32_0 = arith.constant 0 : i32
    return %arg0, %c0_i32 : i32, i32
  }
}

</mosaic_0001>

<llo_original>
// kernel: transformer_forward.2
$region0: #{transformer_forward.2}
  #allocation0 [shape = 'u32[]', space=smem, size = 0x4, offset = 0x4, fixed_abs, tag = 'smem constant byte address 0x4 - core index']
  #allocation1 [shape = 'u32[144,128]{1,0:T(1,128)}', space=vmem, size = 0x12000, scoped, tag = 'internal scratch']
  #allocation2 [shape = 'f32[8,128]{1,0:T(8,128)}', space=vmem, size = 0x1000, scoped, tag = 'scratch operand']
  #allocation3 [shape = 's32[8]{0}', space=sflag, size = 0x20, scoped, tag = 'scratch operand']
  #allocation4 [shape = 's32[1]{0}', space=sflag, size = 0x4, scoped, tag = 'scoped memory for transformer_forward.2']
  #allocation5 [shape = 'u8[512]{0}', space=smem, size = 0x200, scoped, tag = 'prefetched SMEM operand 0']
  #allocation6 [shape = 's32[]', space=sflag, size = 0x4, offset = 0, fixed_abs, tag = 'sflag constant byte address 0x0 - dummy sync flag']
  #allocation7 [shape = 's32[]', space=sflag, size = 0x4, offset = 0, fixed_abs, tag = 'sflag constant byte address 0x0 - dummy sync flag']
  #allocation8 [shape = 'u32[]', space=smem, size = 0x4, offset = 0x44, fixed_abs, tag = 'smem constant byte address 0x44 - assertion arg 0']
  #allocation9 [shape = 'u32[]', space=smem, size = 0x4, offset = 0x48, fixed_abs, tag = 'smem constant byte address 0x48 - assertion arg 1']
  #allocation10 [shape = 's32[]', space=sflag, size = 0x4, offset = 0, fixed_abs, tag = 'sflag constant byte address 0x0 - dummy sync flag']
  #allocation11 [shape = 's32[]', space=sflag, size = 0x4, offset = 0, fixed_abs, tag = 'sflag constant byte address 0x0 - dummy sync flag']
  #allocation12 [shape = 's32[]', space=sflag, size = 0x4, offset = 0, fixed_abs, tag = 'sflag constant byte address 0x0 - dummy sync flag']
  #allocation13 [shape = 's32[]', space=sflag, size = 0x4, offset = 0, fixed_abs, tag = 'sflag constant byte address 0x0 - dummy sync flag']
  #allocation14 [shape = 's32[]', space=sflag, size = 0x4, offset = 0, fixed_abs, tag = 'sflag constant byte address 0x0 - dummy sync flag']
  #allocation15 [shape = 's32[]', space=sflag, size = 0x4, offset = 0, fixed_abs, tag = 'sflag constant byte address 0x0 - dummy sync flag']
  #allocation16 [shape = 's32[]', space=sflag, size = 0x4, offset = 0, fixed_abs, tag = 'sflag constant byte address 0x0 - dummy sync flag']
  #allocation17 [shape = 's32[]', space=sflag, size = 0x4, offset = 0, fixed_abs, tag = 'sflag constant byte address 0x0 - dummy sync flag']
  #allocation18 [shape = 's32[]', space=sflag, size = 0x4, offset = 0, fixed_abs, tag = 'sflag constant byte address 0x0 - dummy sync flag']
  #allocation19 [shape = 's32[]', space=sflag, size = 0x4, offset = 0, fixed_abs, tag = 'sflag constant byte address 0x0 - dummy sync flag']
  #allocation20 [shape = 's32[]', space=sflag, size = 0x4, offset = 0, fixed_abs, tag = 'sflag constant byte address 0x0 - dummy sync flag']
  #allocation21 [shape = 's32[]', space=sflag, size = 0x4, offset = 0, fixed_abs, tag = 'sflag constant byte address 0x0 - dummy sync flag']
  #allocation22 [shape = 's32[]', space=sflag, size = 0x4, offset = 0, fixed_abs, tag = 'sflag constant byte address 0x0 - dummy sync flag']
  #allocation23 [shape = 's32[]', space=sflag, size = 0x4, offset = 0, fixed_abs, tag = 'sflag constant byte address 0x0 - dummy sync flag']
  %s0 = inlined_call_operand.vmem [shape: s32[16], index: 0, kind: input, shape index: {}]
  %s1 = inlined_call_operand.hbm [shape: f32[256,128], index: 1, kind: input, shape index: {}]
  %s2 = inlined_call_operand.vmem [shape: f32[16,128], index: 2, kind: output, shape index: {}]
  %s3 = sld [smem:[#allocation0]]
  $region57: #{transformer_forward.2} parent=0
    _
  %s5 = ssub.s32 1, %s3
  %s6 = scalar_select 0, %s5, %s3
  %s7 = sshll.u32 %s0, 4
  %s8 = int_to_ptr.vmem [resolvable:$true] %s7
  %10 = dma.vmem_to_smem %s8, 16, [#allocation5], [#allocation4]
  %11 = dma.done [#allocation4], 16
  %12 = sfence
  loop: start=0, step=1, limit=3
  $region2: #{transformer_forward.2} parent=0 // loop_pre_header
    _
  $region3: #{transformer_forward.2} parent=0 // loop_header
    %s14 = sphi 0, %s18
    %p15 = scmp.ge.s32.totalorder %s14, 3
    %s23 = sphi 0, %s25
    %s26 = sphi 0, %s23
    %s36 = sphi 0, %s26
  $region4: #{transformer_forward.2} parent=0 // loop_header_branch
    %17 = sbr.rel (%p15) target = $region8
  $region5: #{transformer_forward.2} parent=0 // loop_body
    %s19 = ssub.s32 %s14, 1
    %s20 = sadd.s32 %s14, 1
    %s21 = ssub.s32 %s14, %s20
    %p22 = scmp.eq.s32.totalorder %s21, 0
    %s24 = sadd.s32 %s23, 1
    %s25 = scalar_select %p22, %s23, %s24
    %p27 = pneg %p22
    %p28 = scmp.eq.s32.totalorder %s14, 1
    %p29 = por %p27, %p28
    %p30 = scmp.ne.s32.totalorder %s23, %s26
    %p31 = scmp.eq.s32.totalorder %s14, 0
    %p32 = por %p30, %p31
    %p33 = scmp.ne.s32.totalorder %s23, %s26
    %p34 = scmp.eq.s32.totalorder %s19, 1
    %p35 = por %p33, %p34
    %p37 = scmp.ne.s32.totalorder %s26, %s36
    %p38 = scmp.eq.s32.totalorder %s19, 0
    %p39 = por %p37, %p38
    %p40 = scmp.lt.s32.totalorder %s14, 2
    // Predicated region
    $region9: #{transformer_forward.2} parent=5 // pred_check
      %p41 = pneg %p40
    $region10: #{transformer_forward.2} parent=5 // pred_check_branch
      %43 = sbr.rel (%p41) target = $region12
    $region11: #{transformer_forward.2} parent=5 // pred_region
      %p44 = pneg %p32
      %p45 = pneg %p29
      %p46 = scmp.lt.s32.totalorder %s14, 1
      %s47 = scalar_select %p46, %s14, 1
      %s48 = smul.addr %s47, 8
      %s49 = scalar_lea.vmem %s2, %s48
      %p50 = scmp.lt.s32.totalorder %s14, 1
      %s51 = scalar_select %p50, %s14, 1
      %s52 = smul.addr %s51, 8
      %s53 = scalar_lea.vmem %s2, %s52
      %s54 = smul.u32 %s14, 8
      %s55 = sld [smem:[#allocation5 + %s54]]
      %s56 = smul.addr %s55, 16
      %s57 = scalar_lea.hbm %s1, %s56
      // Predicated region
      $region13: #{transformer_forward.2} parent=11 // pred_check
        _
      $region14: #{transformer_forward.2} parent=11 // pred_check_branch
        %59 = sbr.rel target = $region16
      $region15: #{transformer_forward.2} parent=11 // pred_region
        %60 = sst [smem:[#allocation8]] [#allocation7]
        %61 = sst [smem:[#allocation9]] [#allocation6]
      $region16: #{transformer_forward.2} parent=11 // pred_fallthru
        _
      %63 = shalt.err (0)
      %s65 = sshll.u32 [#allocation2], 4
      %s66 = int_to_ptr.vmem [resolvable:$true] %s65
      %68 = dma.hbm_to_vmem [thread:$0]  %s57, 16, %s66, [#allocation3]
      %s69 = sadd.s32 %s54, 1
      %s70 = sld [smem:[#allocation5 + %s69]]
      %s71 = smul.addr %s70, 16
      %s72 = scalar_lea.hbm %s1, %s71
      %s73 = scalar_lea.vmem [#allocation2], 1
      %s74 = scalar_lea.sflag [#allocation3], 1
      // Predicated region
      $region17: #{transformer_forward.2} parent=11 // pred_check
        _
      $region18: #{transformer_forward.2} parent=11 // pred_check_branch
        %76 = sbr.rel target = $region20
      $region19: #{transformer_forward.2} parent=11 // pred_region
        %77 = sst [smem:[#allocation8]] [#allocation11]
        %78 = sst [smem:[#allocation9]] [#allocation10]
      $region20: #{transformer_forward.2} parent=11 // pred_fallthru
        _
      %80 = shalt.err (0)
      %s82 = sshll.u32 %s73, 4
      %s83 = int_to_ptr.vmem [resolvable:$true] %s82
      %85 = dma.hbm_to_vmem [thread:$0]  %s72, 16, %s83, %s74
      %s86 = sadd.s32 %s54, 2
      %s87 = sld [smem:[#allocation5 + %s86]]
      %s88 = smul.addr %s87, 16
      %s89 = scalar_lea.hbm %s1, %s88
      %s90 = scalar_lea.vmem [#allocation2], 2
      %s91 = scalar_lea.sflag [#allocation3], 2
      // Predicated region
      $region21: #{transformer_forward.2} parent=11 // pred_check
        _
      $region22: #{transformer_forward.2} parent=11 // pred_check_branch
        %93 = sbr.rel target = $region24
      $region23: #{transformer_forward.2} parent=11 // pred_region
        %94 = sst [smem:[#allocation8]] [#allocation13]
        %95 = sst [smem:[#allocation9]] [#allocation12]
      $region24: #{transformer_forward.2} parent=11 // pred_fallthru
        _
      %97 = shalt.err (0)
      %s99 = sshll.u32 %s90, 4
      %s100 = int_to_ptr.vmem [resolvable:$true] %s99
      %102 = dma.hbm_to_vmem [thread:$0]  %s89, 16, %s100, %s91
      %s103 = sadd.s32 %s54, 3
      %s104 = sld [smem:[#allocation5 + %s103]]
      %s105 = smul.addr %s104, 16
      %s106 = scalar_lea.hbm %s1, %s105
      %s107 = scalar_lea.vmem [#allocation2], 3
      %s108 = scalar_lea.sflag [#allocation3], 3
      // Predicated region
      $region25: #{transformer_forward.2} parent=11 // pred_check
        _
      $region26: #{transformer_forward.2} parent=11 // pred_check_branch
        %110 = sbr.rel target = $region28
      $region27: #{transformer_forward.2} parent=11 // pred_region
        %111 = sst [smem:[#allocation8]] [#allocation15]
        %112 = sst [smem:[#allocation9]] [#allocation14]
      $region28: #{transformer_forward.2} parent=11 // pred_fallthru
        _
      %114 = shalt.err (0)
      %s116 = sshll.u32 %s107, 4
      %s117 = int_to_ptr.vmem [resolvable:$true] %s116
      %119 = dma.hbm_to_vmem [thread:$0]  %s106, 16, %s117, %s108
      %s120 = sadd.s32 %s54, 4
      %s121 = sld [smem:[#allocation5 + %s120]]
      %s122 = smul.addr %s121, 16
      %s123 = scalar_lea.hbm %s1, %s122
      %s124 = scalar_lea.vmem [#allocation2], 4
      %s125 = scalar_lea.sflag [#allocation3], 4
      // Predicated region
      $region29: #{transformer_forward.2} parent=11 // pred_check
        _
      $region30: #{transformer_forward.2} parent=11 // pred_check_branch
        %127 = sbr.rel target = $region32
      $region31: #{transformer_forward.2} parent=11 // pred_region
        %128 = sst [smem:[#allocation8]] [#allocation17]
        %129 = sst [smem:[#allocation9]] [#allocation16]
      $region32: #{transformer_forward.2} parent=11 // pred_fallthru
        _
      %131 = shalt.err (0)
      %s133 = sshll.u32 %s124, 4
      %s134 = int_to_ptr.vmem [resolvable:$true] %s133
      %136 = dma.hbm_to_vmem [thread:$0]  %s123, 16, %s134, %s125
      %s137 = sadd.s32 %s54, 5
      %s138 = sld [smem:[#allocation5 + %s137]]
      %s139 = smul.addr %s138, 16
      %s140 = scalar_lea.hbm %s1, %s139
      %s141 = scalar_lea.vmem [#allocation2], 5
      %s142 = scalar_lea.sflag [#allocation3], 5
      // Predicated region
      $region33: #{transformer_forward.2} parent=11 // pred_check
        _
      $region34: #{transformer_forward.2} parent=11 // pred_check_branch
        %144 = sbr.rel target = $region36
      $region35: #{transformer_forward.2} parent=11 // pred_region
        %145 = sst [smem:[#allocation8]] [#allocation19]
        %146 = sst [smem:[#allocation9]] [#allocation18]
      $region36: #{transformer_forward.2} parent=11 // pred_fallthru
        _
      %148 = shalt.err (0)
      %s150 = sshll.u32 %s141, 4
      %s151 = int_to_ptr.vmem [resolvable:$true] %s150
      %153 = dma.hbm_to_vmem [thread:$0]  %s140, 16, %s151, %s142
      %s154 = sadd.s32 %s54, 6
      %s155 = sld [smem:[#allocation5 + %s154]]
      %s156 = smul.addr %s155, 16
      %s157 = scalar_lea.hbm %s1, %s156
      %s158 = scalar_lea.vmem [#allocation2], 6
      %s159 = scalar_lea.sflag [#allocation3], 6
      // Predicated region
      $region37: #{transformer_forward.2} parent=11 // pred_check
        _
      $region38: #{transformer_forward.2} parent=11 // pred_check_branch
        %161 = sbr.rel target = $region40
      $region39: #{transformer_forward.2} parent=11 // pred_region
        %162 = sst [smem:[#allocation8]] [#allocation21]
        %163 = sst [smem:[#allocation9]] [#allocation20]
      $region40: #{transformer_forward.2} parent=11 // pred_fallthru
        _
      %165 = shalt.err (0)
      %s167 = sshll.u32 %s158, 4
      %s168 = int_to_ptr.vmem [resolvable:$true] %s167
      %170 = dma.hbm_to_vmem [thread:$0]  %s157, 16, %s168, %s159
      %s171 = sadd.s32 %s54, 7
      %s172 = sld [smem:[#allocation5 + %s171]]
      %s173 = smul.addr %s172, 16
      %s174 = scalar_lea.hbm %s1, %s173
      %s175 = scalar_lea.vmem [#allocation2], 7
      %s176 = scalar_lea.sflag [#allocation3], 7
      // Predicated region
      $region41: #{transformer_forward.2} parent=11 // pred_check
        _
      $region42: #{transformer_forward.2} parent=11 // pred_check_branch
        %178 = sbr.rel target = $region44
      $region43: #{transformer_forward.2} parent=11 // pred_region
        %179 = sst [smem:[#allocation8]] [#allocation23]
        %180 = sst [smem:[#allocation9]] [#allocation22]
      $region44: #{transformer_forward.2} parent=11 // pred_fallthru
        _
      %182 = shalt.err (0)
      %s184 = sshll.u32 %s175, 4
      %s185 = int_to_ptr.vmem [resolvable:$true] %s184
      %187 = dma.hbm_to_vmem [thread:$0]  %s174, 16, %s185, %s176
      %189 = dma.done [#allocation3], 16
      %191 = dma.done %s74, 16
      %193 = dma.done %s91, 16
      %195 = dma.done %s108, 16
      %197 = dma.done %s125, 16
      %199 = dma.done %s142, 16
      %201 = dma.done %s159, 16
      %203 = dma.done %s176, 16
      %v204 = vld [vmem:[#allocation2] sm:$0xff]
      %205 = vst [vmem:[%s53] sm:$0xff] %v204
      %p206 = scmp.lt.s32.totalorder %s14, 1
      %s207 = scalar_select %p206, %s14, 1
      %s208 = smul.addr %s207, 8
      %s209 = scalar_lea.vmem %s2, %s208
      // Predicated region
      $region45: #{transformer_forward.2} parent=11 // pred_check
        %p210 = pneg %p29
      $region46: #{transformer_forward.2} parent=11 // pred_check_branch
        %212 = sbr.rel (%p210) target = $region48
      $region47: #{transformer_forward.2} parent=11 // pred_region
        _
      $region48: #{transformer_forward.2} parent=11 // pred_fallthru
        _
    $region12: #{transformer_forward.2} parent=5 // pred_fallthru
      _
    %p213 = scmp.le.s32.totalorder 1, %s14
    // Predicated region
    $region49: #{transformer_forward.2} parent=5 // pred_check
      %p214 = pneg %p213
    $region50: #{transformer_forward.2} parent=5 // pred_check_branch
      %216 = sbr.rel (%p214) target = $region52
    $region51: #{transformer_forward.2} parent=5 // pred_region
      %s217 = ssub.s32 %s14, 1
      // Predicated region
      $region53: #{transformer_forward.2} parent=51 // pred_check
        %p218 = pneg %p35
      $region54: #{transformer_forward.2} parent=51 // pred_check_branch
        %220 = sbr.rel (%p218) target = $region56
      $region55: #{transformer_forward.2} parent=51 // pred_region
        %p221 = scmp.lt.s32.totalorder %s19, 1
        %s222 = scalar_select %p221, %s19, 1
        %s223 = smul.addr %s222, 8
        %s224 = scalar_lea.vmem %s2, %s223
      $region56: #{transformer_forward.2} parent=51 // pred_fallthru
        _
    $region52: #{transformer_forward.2} parent=5 // pred_fallthru
      _
  $region6: #{transformer_forward.2} parent=0 // loop_footer
    %s18 = sadd.s32 1, %s14
  $region7: #{transformer_forward.2} parent=0 // loop_footer_branch
    %13 = sbr.rel target = $region3
  $region8: #{transformer_forward.2} parent=0 // loop_exit
    _
  %225 = vsyncmov [#allocation3]
  %s226 = vpop.sfrf %225
  %p227 = scmp.eq.s32.totalorder %s226, 0
  %p228 = pneg %p227
  %230 = shalt.err (%p228)
  %s231 = scalar_lea.sflag [#allocation3], 1
  %232 = vsyncmov %s231
  %s233 = vpop.sfrf %232
  %p234 = scmp.eq.s32.totalorder %s233, 0
  %p235 = pneg %p234
  %237 = shalt.err (%p235)
  %s238 = scalar_lea.sflag [#allocation3], 2
  %239 = vsyncmov %s238
  %s240 = vpop.sfrf %239
  %p241 = scmp.eq.s32.totalorder %s240, 0
  %p242 = pneg %p241
  %244 = shalt.err (%p242)
  %s245 = scalar_lea.sflag [#allocation3], 3
  %246 = vsyncmov %s245
  %s247 = vpop.sfrf %246
  %p248 = scmp.eq.s32.totalorder %s247, 0
  %p249 = pneg %p248
  %251 = shalt.err (%p249)
  %s252 = scalar_lea.sflag [#allocation3], 4
  %253 = vsyncmov %s252
  %s254 = vpop.sfrf %253
  %p255 = scmp.eq.s32.totalorder %s254, 0
  %p256 = pneg %p255
  %258 = shalt.err (%p256)
  %s259 = scalar_lea.sflag [#allocation3], 5
  %260 = vsyncmov %s259
  %s261 = vpop.sfrf %260
  %p262 = scmp.eq.s32.totalorder %s261, 0
  %p263 = pneg %p262
  %265 = shalt.err (%p263)
  %s266 = scalar_lea.sflag [#allocation3], 6
  %267 = vsyncmov %s266
  %s268 = vpop.sfrf %267
  %p269 = scmp.eq.s32.totalorder %s268, 0
  %p270 = pneg %p269
  %272 = shalt.err (%p270)
  %s273 = scalar_lea.sflag [#allocation3], 7
  %274 = vsyncmov %s273
  %s275 = vpop.sfrf %274
  %p276 = scmp.eq.s32.totalorder %s275, 0
  %p277 = pneg %p276
  %279 = shalt.err (%p277)

// kernel: transformer_forward.3
$region0: #{transformer_forward.3}
  #allocation0 [shape = 'u32[]', space=smem, size = 0x4, offset = 0x4, fixed_abs, tag = 'smem constant byte address 0x4 - core index']
  #allocation1 [shape = 'u32[144,128]{1,0:T(1,128)}', space=vmem, size = 0x12000, scoped, tag = 'internal scratch']
  %s0 = inlined_call_operand.vmem [shape: bf16[16,128], index: 0, kind: input, shape index: {}]
  %s1 = inlined_call_operand.vmem [shape: bf16[128,256], index: 1, kind: input, shape index: {}]
  %s2 = inlined_call_operand.vmem [shape: f32[1,256], index: 2, kind: input, shape index: {}]
  %s3 = inlined_call_operand.hbm [shape: f32[16,256], index: 3, kind: output, shape index: {}]
  %s4 = sld [smem:[#allocation0]]
  $region30: #{transformer_forward.3} parent=0
    _
  %s6 = ssub.s32 1, %s4
  %s7 = scalar_select 0, %s6, %s4
  $region1: #{transformer_forward.3} parent=0
    #allocation2 [shape = 'u8[16384]{0}', space=vmem, size = 0x4000, scoped, tag = 'output window, operand 0, single buffered']
    #allocation3 [shape = 's32[1]{0}', space=sflag, size = 0x4, scoped, tag = 'scoped memory for transformer_forward.3']
    %8 = vsyncpa [#allocation3], 0
    // Predicated region
    $region2: #{transformer_forward.3} parent=1 // pred_check
      _
    $region3: #{transformer_forward.3} parent=1 // pred_check_branch
      %10 = sbr.rel (0) target = $region5
    $region4: #{transformer_forward.3} parent=1 // pred_region
      _
    $region5: #{transformer_forward.3} parent=1 // pred_fallthru
      _
    // Predicated region
    $region6: #{transformer_forward.3} parent=1 // pred_check
      _
    $region7: #{transformer_forward.3} parent=1 // pred_check_branch
      %12 = sbr.rel (0) target = $region9
    $region8: #{transformer_forward.3} parent=1 // pred_region
      _
    $region9: #{transformer_forward.3} parent=1 // pred_fallthru
      _
    // Predicated region
    $region10: #{transformer_forward.3} parent=1 // pred_check
      _
    $region11: #{transformer_forward.3} parent=1 // pred_check_branch
      %14 = sbr.rel (0) target = $region13
    $region12: #{transformer_forward.3} parent=1 // pred_region
      _
    $region13: #{transformer_forward.3} parent=1 // pred_fallthru
      _
    %p16 = scmp.eq.s32.totalorder 0, 0
    // Predicated region
    $region14: #{transformer_forward.3} parent=1 // pred_check
      %p17 = pneg %p16
    $region15: #{transformer_forward.3} parent=1 // pred_check_branch
      %19 = sbr.rel (%p17) target = $region17
    $region16: #{transformer_forward.3} parent=1 // pred_region
      %20 = vst [vmem:[#allocation2] sm:$0xff] 0.0
      %21 = vst [vmem:[#allocation2 + $0x8] sm:$0xff] 0.0
      %22 = vst [vmem:[#allocation2 + $0x10] sm:$0xff] 0.0
      %23 = vst [vmem:[#allocation2 + $0x18] sm:$0xff] 0.0
    $region17: #{transformer_forward.3} parent=1 // pred_fallthru
      _
    %v24 = vld [vmem:[#allocation2] sm:$0xff]
    %v25 = vld [vmem:[#allocation2 + $0x8] sm:$0xff]
    %v26 = vld [vmem:[#allocation2 + $0x10] sm:$0xff]
    %v27 = vld [vmem:[#allocation2 + $0x18] sm:$0xff]
    %v28 = vld [vmem:[%s0] sm:$0xf]
    %v29 = vld [vmem:[%s0 + $0x4] sm:$0xf]
    %v30 = vld [vmem:[%s1] sm:$0xff]
    %v31 = vld [vmem:[%s1 + $0x8] sm:$0xff]
    %v32 = vld [vmem:[%s1 + $0x10] sm:$0xff]
    %v33 = vld [vmem:[%s1 + $0x18] sm:$0xff]
    %v34 = vld [vmem:[%s1 + $0x20] sm:$0xff]
    %v35 = vld [vmem:[%s1 + $0x28] sm:$0xff]
    %v36 = vld [vmem:[%s1 + $0x30] sm:$0xff]
    %v37 = vld [vmem:[%s1 + $0x38] sm:$0xff]
    %v38 = vld [vmem:[%s1 + $0x40] sm:$0xff]
    %v39 = vld [vmem:[%s1 + $0x48] sm:$0xff]
    %v40 = vld [vmem:[%s1 + $0x50] sm:$0xff]
    %v41 = vld [vmem:[%s1 + $0x58] sm:$0xff]
    %v42 = vld [vmem:[%s1 + $0x60] sm:$0xff]
    %v43 = vld [vmem:[%s1 + $0x68] sm:$0xff]
    %v44 = vld [vmem:[%s1 + $0x70] sm:$0xff]
    %v45 = vld [vmem:[%s1 + $0x78] sm:$0xff]
    %v48 = vunpack.c.l.b16 %v28
    %v49 = vunpack.c.l.b16 %v29
    %v50 = vpack.c.b16 %v49, %v48
    %v68 = vunpack.c.l.b16 %v30
    %v69 = vunpack.c.h.b16 %v30
    %v70 = vunpack.c.l.b16 %v31
    %v71 = vunpack.c.h.b16 %v31
    %v72 = vunpack.c.l.b16 %v32
    %v73 = vunpack.c.h.b16 %v32
    %v74 = vunpack.c.l.b16 %v33
    %v75 = vunpack.c.h.b16 %v33
    %v76 = vunpack.c.l.b16 %v34
    %v77 = vunpack.c.h.b16 %v34
    %v78 = vunpack.c.l.b16 %v35
    %v79 = vunpack.c.h.b16 %v35
    %v80 = vunpack.c.l.b16 %v36
    %v81 = vunpack.c.h.b16 %v36
    %v82 = vunpack.c.l.b16 %v37
    %v83 = vunpack.c.h.b16 %v37
    %v84 = vunpack.c.l.b16 %v38
    %v85 = vunpack.c.h.b16 %v38
    %v86 = vunpack.c.l.b16 %v39
    %v87 = vunpack.c.h.b16 %v39
    %v88 = vunpack.c.l.b16 %v40
    %v89 = vunpack.c.h.b16 %v40
    %v90 = vunpack.c.l.b16 %v41
    %v91 = vunpack.c.h.b16 %v41
    %v92 = vunpack.c.l.b16 %v42
    %v93 = vunpack.c.h.b16 %v42
    %v94 = vunpack.c.l.b16 %v43
    %v95 = vunpack.c.h.b16 %v43
    %v96 = vunpack.c.l.b16 %v44
    %v97 = vunpack.c.h.b16 %v44
    %v98 = vunpack.c.l.b16 %v45
    %v99 = vunpack.c.h.b16 %v45
    %v100 = vpack.c.b16 %v70, %v68
    %v101 = vpack.c.b16 %v71, %v69
    %v102 = vpack.c.b16 %v74, %v72
    %v103 = vpack.c.b16 %v75, %v73
    %v104 = vpack.c.b16 %v78, %v76
    %v105 = vpack.c.b16 %v79, %v77
    %v106 = vpack.c.b16 %v82, %v80
    %v107 = vpack.c.b16 %v83, %v81
    %v108 = vpack.c.b16 %v86, %v84
    %v109 = vpack.c.b16 %v87, %v85
    %v110 = vpack.c.b16 %v90, %v88
    %v111 = vpack.c.b16 %v91, %v89
    %v112 = vpack.c.b16 %v94, %v92
    %v113 = vpack.c.b16 %v95, %v93
    %v114 = vpack.c.b16 %v98, %v96
    %v115 = vpack.c.b16 %v99, %v97
    %132 = vmatprep.subr.bf16.mxu0 %v101
    %133 = vmatpush1.bf16.msra.mxu0 %v100
    %134 = vmatprep.subr.bf16.mxu0 %v103
    %135 = vmatpush1.bf16.msra.mxu0 %v102
    %136 = vmatprep.subr.bf16.mxu0 %v105
    %137 = vmatpush1.bf16.msra.mxu0 %v104
    %138 = vmatprep.subr.bf16.mxu0 %v107
    %139 = vmatpush1.bf16.msra.mxu0 %v106
    %140 = vmatprep.subr.bf16.mxu0 %v109
    %141 = vmatpush1.bf16.msra.mxu0 %v108
    %142 = vmatprep.subr.bf16.mxu0 %v111
    %143 = vmatpush1.bf16.msra.mxu0 %v110
    %144 = vmatprep.subr.bf16.mxu0 %v113
    %145 = vmatpush1.bf16.msra.mxu0 %v112
    %146 = vmatprep.subr.bf16.mxu0 %v115
    %147 = vmatpush1.bf16.msra.mxu0 %v114
    %148 = vmatprep.subr.bf16.mxu0 0
    %149 = vmatpush1.bf16.msra.mxu0 0
    %150 = vmatprep.subr.bf16.mxu0 0
    %151 = vmatpush1.bf16.msra.mxu0 0
    %152 = vmatprep.subr.bf16.mxu0 0
    %153 = vmatpush1.bf16.msra.mxu0 0
    %154 = vmatprep.subr.bf16.mxu0 0
    %155 = vmatpush1.bf16.msra.mxu0 0
    %156 = vmatprep.subr.bf16.mxu0 0
    %157 = vmatpush1.bf16.msra.mxu0 0
    %158 = vmatprep.subr.bf16.mxu0 0
    %159 = vmatpush1.bf16.msra.mxu0 0
    %160 = vmatprep.subr.bf16.mxu0 0
    %161 = vmatpush1.bf16.msra.mxu0 0
    %162 = vmatprep.subr.bf16.mxu0 0
    %163 = vmatpush1.bf16.msra.mxu0 0
    %164 = vmatprep.mubr.bf16.mxu0 0
    %165 = vmatmul.mubr.bf16.gmra.mrb[0].mxu0 %v50
    %v166 = vpop.f32.mrb[0].mxu0
    %v167 = vadd.f32 0.0, %v166
    %v168 = vpop.f32.mrb[0].mxu0
    %v169 = vadd.f32 0.0, %v168
    %v170 = vpop.f32.mrb[0].mxu0
    %v171 = vadd.f32 0.0, %v170
    %v172 = vpop.f32.mrb[0].mxu0
    %v173 = vadd.f32 0.0, %v172
    %174 = vdwg.mxu0
    %v175 = vadd.f32 %v24, %v167
    %v176 = vadd.f32 %v25, %v169
    %v177 = vadd.f32 %v26, %v171
    %v178 = vadd.f32 %v27, %v173
    %179 = vst [vmem:[#allocation2] sm:$0xff] %v175
    %180 = vst [vmem:[#allocation2 + $0x8] sm:$0xff] %v176
    %181 = vst [vmem:[#allocation2 + $0x10] sm:$0xff] %v177
    %182 = vst [vmem:[#allocation2 + $0x18] sm:$0xff] %v178
    // Predicated region
    $region18: #{transformer_forward.3} parent=1 // pred_check
      %p183 = pneg %p16
    $region19: #{transformer_forward.3} parent=1 // pred_check_branch
      %185 = sbr.rel (%p183) target = $region21
    $region20: #{transformer_forward.3} parent=1 // pred_region
      %v186 = vld [vmem:[#allocation2] sm:$0xff]
      %v187 = vld [vmem:[#allocation2 + $0x8] sm:$0xff]
      %v188 = vld [vmem:[#allocation2 + $0x10] sm:$0xff]
      %v189 = vld [vmem:[#allocation2 + $0x18] sm:$0xff]
      %v190 = vld [vmem:[%s2] sm:$0x3]
      %v192 = vlaneseq
      %v193 = vshrl.u32 %v192, 7
      %v194 = vsub.s32 0, %v193
      %v195 = vrot.slane %v190, %v194
      %v196 = vlaneseq
      %v197 = vshrl.u32 %v196, 7
      %v198 = vsub.s32 1, %v197
      %v199 = vrot.slane %v190, %v198
      %v202 = vadd.f32 %v186, %v195
      %v203 = vadd.f32 %v187, %v199
      %v204 = vadd.f32 %v188, %v195
      %v205 = vadd.f32 %v189, %v199
      %206 = vst [vmem:[#allocation2] sm:$0xff] %v202
      %207 = vst [vmem:[#allocation2 + $0x8] sm:$0xff] %v203
      %208 = vst [vmem:[#allocation2 + $0x10] sm:$0xff] %v204
      %209 = vst [vmem:[#allocation2 + $0x18] sm:$0xff] %v205
    $region21: #{transformer_forward.3} parent=1 // pred_fallthru
      _
    // Predicated region
    $region22: #{transformer_forward.3} parent=1 // pred_check
      _
    $region23: #{transformer_forward.3} parent=1 // pred_check_branch
      %211 = sbr.rel (0) target = $region25
    $region24: #{transformer_forward.3} parent=1 // pred_region
      %s213 = ssub.s32 512, 512
      %214 = vsyncadd [#allocation3], %s213
      %s215 = sshll.u32 [#allocation2], 4
      %s216 = int_to_ptr.vmem [resolvable:$true] %s215
      %221 = dma.vmem_to_hbm [thread:$0]  %s216, 512, %s3, [#allocation3], 256, 256, 16
    $region25: #{transformer_forward.3} parent=1 // pred_fallthru
      _
    // Predicated region
    $region26: #{transformer_forward.3} parent=1 // pred_check
      _
    $region27: #{transformer_forward.3} parent=1 // pred_check_branch
      %223 = sbr.rel (0) target = $region29
    $region28: #{transformer_forward.3} parent=1 // pred_region
      %224 = dma.done [#allocation3], 512
    $region29: #{transformer_forward.3} parent=1 // pred_fallthru
      _
    %225 = vsyncpa [#allocation3], 1

</llo_original>
